<compile_context>
chip_gen: v6e
topology: v6e:2x2x1
jax: 0.10.0
libtpu: 0.0.40
codegen_flags: <defaults>
</compile_context>

<pallas_src>
import functools
import math

import jax
import jax.numpy as jnp
from jax.experimental import pallas as pl
from jax.experimental.pallas import tpu as pltpu


_ACTS = ("relu", "tanh", "sigmoid")


def _f(e):
    # factorized-noise transform f(e) = sign(e) * sqrt(|e|)
    return jnp.sign(e) * jnp.sqrt(jnp.abs(e))


def _apply_act(y, act):
    if act == "relu":
        return jnp.maximum(y, 0.0)
    if act == "tanh":
        return jnp.tanh(y)
    if act == "sigmoid":
        return jax.nn.sigmoid(y)
    return y  # identity


def _noisy_mlp_kernel(*refs, activations):
    """Fused NoisyMLP forward for one batch tile, [features, batch] layout.

    refs = (x_ref,
            wpk0, fout0, beff0,   # layer 0
            wpk1, fout1, beff1,   # layer 1
            ...,
            o_ref)

    x_ref : [In0, TB]       batch on the 128-lane axis
    wpk   : [2*Out, In]     packed [W ; sigma_W * f(eps_in)]
    fout  : [Out, 1]        f(eps_out)
    beff  : [Out, 1]        b + sigma_b * f(eps_out)
    o_ref : [Out_last, TB]
    """
    n_layers = len(activations)
    x_ref = refs[0]
    o_ref = refs[1 + 3 * n_layers]

    h = x_ref[...].astype(jnp.float32)                        # [In0, TB]
    for li, act in enumerate(activations):
        wpk_ref, fout_ref, beff_ref = refs[1 + 3 * li: 4 + 3 * li]
        out_f = fout_ref.shape[0]

        # Single MXU pass per layer: [2*Out, In] @ [In, TB] -> [2*Out, TB].
        # Rank-1 identity: W_eff @ h == W @ h + f_out * ((sigma_W * f_in) @ h).
        z = jnp.dot(wpk_ref[...], h, preferred_element_type=jnp.float32)
        y = z[:out_f, :] + z[out_f:, :] * fout_ref[...] + beff_ref[...]   # [Out, TB]
        h = _apply_act(y, act)

    o_ref[...] = h.astype(o_ref.dtype)


def _num_tensorcores_per_chip():
    """2 TensorCores/chip on v4/v5p (megacore) and v7x; 1 on v5e/v6e (v2/v3 expose one
    core per device). Fallback 1 (single-block grid is always correct)."""
    try:
        kind = jax.devices()[0].device_kind.lower()
    except Exception:
        return 1
    if ("v4" in kind) or ("v5p" in kind) or ("7" in kind):
        return 2
    return 1


_MAX_LANE_TILE = 2048  # keeps x/h/out tiles far inside VMEM even on v7x (64 MiB physical)


def _pick_batch_tile(batch, n_cores):
    """Batch sits on the lane axis, so a tile must be a multiple of 128 or the full batch.
    1-TC chips: single block (every extra grid step is pure serial overhead here).
    2-TC chips: exactly one block per core when the batch splits into two 128-multiples."""
    if batch % 128 != 0:
        return batch                                   # small / ragged: single block
    if n_cores >= 2 and batch % 256 == 0 and batch // 2 <= _MAX_LANE_TILE:
        return batch // 2                              # one block per TensorCore
    if batch <= _MAX_LANE_TILE:
        return batch                                   # 1 TC: single block
    for tb in range(_MAX_LANE_TILE, 127, -128):        # very large batch: cap the tile
        if batch % tb == 0:
            return tb
    return batch


@functools.partial(jax.jit, static_argnames=("activation", "out_activation"))
def noisy_mlp_forward(x, layer_params, layer_noise, *, activation, out_activation):
    """NoisyMLP.forward: hidden layers use `activation` (fallback relu), the final layer
    uses `out_activation` (identity if not relu/tanh/sigmoid). Single fused kernel."""
    n_layers = len(layer_params)
    hidden_act = activation if activation in _ACTS else "relu"
    final_act = out_activation if out_activation in _ACTS else "none"
    activations = tuple(hidden_act if i < n_layers - 1 else final_act
                        for i in range(n_layers))

    batch, in_dim = x.shape
    out_dim = layer_params[-1]["w"].shape[0]
    tb = _pick_batch_tile(batch, _num_tensorcores_per_chip())
    grid = (batch // tb,)

    # ---- grid-invariant, per-call preprocessing (fused by XLA in this jit) ----------
    args = [x.T.astype(jnp.float32)]                           # [In0, B]
    in_specs = [pl.BlockSpec((in_dim, tb), lambda i: (0, i))]
    for p, (eps_in, eps_out) in zip(layer_params, layer_noise):
        f_in = _f(eps_in)                                      # [1, In]
        f_out = _f(eps_out)                                    # [Out, 1]
        w_packed = jnp.concatenate([p["w"], p["sw"] * f_in], axis=0)   # [2*Out, In]
        b_eff = p["b"] + p["sb"] * f_out                       # [Out, 1]
        for arr in (w_packed, f_out, b_eff):
            args.append(arr)
            # Whole-array blocks with a constant index map: kept VMEM-resident across
            # the batch grid. TODO(synk): when hidden widths grow (>=128), switch these
            # to pipeline_mode=pl.Buffered(1), set vmem_limit_bytes in CompilerParams,
            # and cast the packed weights to bf16 for the MXU; at 16/32/8-wide layers
            # all three are noise.
            in_specs.append(pl.BlockSpec(arr.shape, lambda i: (0, 0)))

    kernel = functools.partial(_noisy_mlp_kernel, activations=activations)

    out_t = pl.pallas_call(
        kernel,
        out_shape=jax.ShapeDtypeStruct((out_dim, batch), jnp.float32),
        grid=grid,
        in_specs=in_specs,
        out_specs=pl.BlockSpec((out_dim, tb), lambda i: (0, i)),
        compiler_params=pltpu.CompilerParams(
            dimension_semantics=("parallel",),
        ),
    )(*args)
    return out_t.T                                             # back to [batch, Out]


def init_noisy_linear(key, in_f, out_f, sigma_zero=0.4):
    """Matches NoisyFactorizedLinear.__init__: nn.Linear default uniform init, sigma
    params filled with sigma_zero/sqrt(in_f). Bias-like tensors are stored as [out_f, 1]
    columns (the [feat, batch] kernel layout) so no per-forward reshape is needed."""
    kw, kb = jax.random.split(key)
    bound = 1.0 / math.sqrt(in_f)
    w = jax.random.uniform(kw, (out_f, in_f), jnp.float32, -bound, bound)
    b = jax.random.uniform(kb, (out_f, 1), jnp.float32, -bound, bound)
    sigma_init = sigma_zero / math.sqrt(in_f)
    sw = jnp.full((out_f, in_f), sigma_init, jnp.float32)
    sb = jnp.full((out_f, 1), sigma_init, jnp.float32)
    return dict(w=w, sw=sw, b=b, sb=sb)


def sample_layer_noise(key, in_f, out_f):
    """Deterministic factorized-noise draws (stand-in for PyTorch's per-forward
    .normal_()): eps_in [1, in_f], eps_out [out_f, 1]."""
    # TODO(synk): could be drawn in-kernel via pltpu.prng_seed + pltpu.stateful_normal;
    # kept as explicit inputs so the forward stays a pure function of its arguments.
    ki, ko = jax.random.split(key)
    eps_in = jax.random.normal(ki, (1, in_f), jnp.float32)
    eps_out = jax.random.normal(ko, (out_f, 1), jnp.float32)
    return eps_in, eps_out


def noisy_mlp_reference(x, layer_params, layer_noise, activation, out_activation):
    """Pure-JAX reference that materializes W_eff exactly like the PyTorch module."""
    n = len(layer_params)
    hidden_act = activation if activation in _ACTS else "relu"
    final_act = out_activation if out_activation in _ACTS else "none"
    h = x
    for i, (p, (eps_in, eps_out)) in enumerate(zip(layer_params, layer_noise)):
        f_in = _f(eps_in)                                   # [1, In]
        f_out = _f(eps_out)                                 # [Out, 1]
        w_eff = p["w"] + p["sw"] * (f_out @ f_in)           # [Out, In]
        b_eff = p["b"] + p["sb"] * f_out                    # [Out, 1]
        y = h @ w_eff.T + b_eff.T
        h = _apply_act(y, hidden_act if i < n - 1 else final_act)
    return h


if __name__ == "__main__":
    config = {
        "layers": [32, 32],
        "in_channel": 16,
        "out_channel": 8,
        "activation": "relu",
        "out_activation": "tanh",
    }

    root = jax.random.PRNGKey(0)
    k_x, k_params, k_noise, k_xbig = jax.random.split(root, 4)

    dims = [config["in_channel"]] + list(config["layers"]) + [config["out_channel"]]
    n_layers = len(dims) - 1

    param_keys = jax.random.split(k_params, n_layers)
    layer_params = [init_noisy_linear(param_keys[i], dims[i], dims[i + 1])
                    for i in range(n_layers)]

    noise_keys = jax.random.split(k_noise, n_layers)
    layer_noise = [sample_layer_noise(noise_keys[i], dims[i], dims[i + 1])
                   for i in range(n_layers)]

    # --- small batch (module-implied shape): single-block fused kernel ---
    x_small = jax.random.normal(k_x, (2, config["in_channel"]), jnp.float32)
    out_small = jax.block_until_ready(noisy_mlp_forward(
        x_small, layer_params, layer_noise,
        activation=config["activation"], out_activation=config["out_activation"]))
    ref_small = noisy_mlp_reference(
        x_small, layer_params, layer_noise,
        config["activation"], config["out_activation"])
    assert out_small.shape == (2, config["out_channel"])
    assert bool(jnp.all(jnp.isfinite(out_small)))
    assert bool(jnp.allclose(out_small, ref_small, atol=1e-3, rtol=1e-3)), \
        float(jnp.max(jnp.abs(out_small - ref_small)))

    # --- larger batch: lane-dense [feat, batch] path; 1 block (1 TC) or 2 blocks (2 TC) ---
    x_big = jax.random.normal(k_xbig, (256, config["in_channel"]), jnp.float32)
    out_big = jax.block_until_ready(noisy_mlp_forward(
        x_big, layer_params, layer_noise,
        activation=config["activation"], out_activation=config["out_activation"]))
    ref_big = noisy_mlp_reference(
        x_big, layer_params, layer_noise,
        config["activation"], config["out_activation"])
    assert out_big.shape == (256, config["out_channel"])
    assert bool(jnp.all(jnp.isfinite(out_big)))
    assert bool(jnp.allclose(out_big, ref_big, atol=1e-3, rtol=1e-3)), \
        float(jnp.max(jnp.abs(out_big - ref_big)))

    print("KERNEL_OK")
</pallas_src>

<mosaic_0001>
module attributes {stable_mosaic.version = 11 : i64} {
  func.func @_noisy_mlp_kernel(%arg0: i32, %arg1: memref<16x2xf32, #tpu.memory_space<vmem>>, %arg2: memref<64x16xf32, #tpu.memory_space<vmem>>, %arg3: memref<32x1xf32, #tpu.memory_space<vmem>>, %arg4: memref<32x1xf32, #tpu.memory_space<vmem>>, %arg5: memref<64x32xf32, #tpu.memory_space<vmem>>, %arg6: memref<32x1xf32, #tpu.memory_space<vmem>>, %arg7: memref<32x1xf32, #tpu.memory_space<vmem>>, %arg8: memref<16x32xf32, #tpu.memory_space<vmem>>, %arg9: memref<8x1xf32, #tpu.memory_space<vmem>>, %arg10: memref<8x1xf32, #tpu.memory_space<vmem>>, %arg11: memref<8x2xf32, #tpu.memory_space<vmem>>) attributes {dimension_semantics = [#tpu.dimension_semantics<parallel>], iteration_bounds = array<i64: 1>, scalar_prefetch = 0 : i64, scratch_operands = 0 : i64, tpu.core_type = #tpu.core_type<tc>, window_params = [{transform_indices = @transform_0, window_bounds = array<i64: 16, 2>}, {pipeline_mode = #tpu.pipeline_mode<synchronous>, transform_indices = @transform_1, window_bounds = array<i64: 64, 16>}, {pipeline_mode = #tpu.pipeline_mode<synchronous>, transform_indices = @transform_2, window_bounds = array<i64: 32, 1>}, {pipeline_mode = #tpu.pipeline_mode<synchronous>, transform_indices = @transform_3, window_bounds = array<i64: 32, 1>}, {pipeline_mode = #tpu.pipeline_mode<synchronous>, transform_indices = @transform_4, window_bounds = array<i64: 64, 32>}, {pipeline_mode = #tpu.pipeline_mode<synchronous>, transform_indices = @transform_5, window_bounds = array<i64: 32, 1>}, {pipeline_mode = #tpu.pipeline_mode<synchronous>, transform_indices = @transform_6, window_bounds = array<i64: 32, 1>}, {pipeline_mode = #tpu.pipeline_mode<synchronous>, transform_indices = @transform_7, window_bounds = array<i64: 16, 32>}, {pipeline_mode = #tpu.pipeline_mode<synchronous>, transform_indices = @transform_8, window_bounds = array<i64: 8, 1>}, {pipeline_mode = #tpu.pipeline_mode<synchronous>, transform_indices = @transform_9, window_bounds = array<i64: 8, 1>}, {transform_indices = @transform_10, window_bounds = array<i64: 8, 2>}]} {
    %c0 = arith.constant 0 : index
    %c0_0 = arith.constant 0 : index
    %0 = vector.load %arg1[%c0, %c0_0] : memref<16x2xf32, #tpu.memory_space<vmem>>, vector<16x2xf32>
    %c0_1 = arith.constant 0 : index
    %c0_2 = arith.constant 0 : index
    %1 = vector.load %arg2[%c0_1, %c0_2] : memref<64x16xf32, #tpu.memory_space<vmem>>, vector<64x16xf32>
    %cst = arith.constant dense<0.000000e+00> : vector<64x2xf32>
    %2 = tpu.matmul %1, %0, %cst {dimension_numbers = #tpu.dot_dimension_numbers<[1], [0], [0], [1], [0, 0, 1, 1], [], []>} : vector<64x16xf32>, vector<16x2xf32>, vector<64x2xf32> -> vector<64x2xf32>
    %3 = vector.extract_strided_slice %2 {offsets = [0, 0], sizes = [32, 2], strides = [1, 1]} : vector<64x2xf32> to vector<32x2xf32>
    %4 = vector.extract_strided_slice %2 {offsets = [32, 0], sizes = [32, 2], strides = [1, 1]} : vector<64x2xf32> to vector<32x2xf32>
    %c0_3 = arith.constant 0 : index
    %c0_4 = arith.constant 0 : index
    %5 = vector.load %arg3[%c0_3, %c0_4] : memref<32x1xf32, #tpu.memory_space<vmem>>, vector<32x1xf32>
    %6 = vector.broadcast %5 : vector<32x1xf32> to vector<32x2xf32>
    %7 = arith.mulf %4, %6 : vector<32x2xf32>
    %8 = arith.addf %3, %7 : vector<32x2xf32>
    %c0_5 = arith.constant 0 : index
    %c0_6 = arith.constant 0 : index
    %9 = vector.load %arg4[%c0_5, %c0_6] : memref<32x1xf32, #tpu.memory_space<vmem>>, vector<32x1xf32>
    %10 = vector.broadcast %9 : vector<32x1xf32> to vector<32x2xf32>
    %11 = arith.addf %8, %10 : vector<32x2xf32>
    %cst_7 = arith.constant 0.000000e+00 : f32
    %12 = vector.broadcast %cst_7 : f32 to vector<32x2xf32>
    %13 = arith.maximumf %11, %12 : vector<32x2xf32>
    %c0_8 = arith.constant 0 : index
    %c0_9 = arith.constant 0 : index
    %14 = vector.load %arg5[%c0_8, %c0_9] : memref<64x32xf32, #tpu.memory_space<vmem>>, vector<64x32xf32>
    %cst_10 = arith.constant dense<0.000000e+00> : vector<64x2xf32>
    %15 = tpu.matmul %14, %13, %cst_10 {dimension_numbers = #tpu.dot_dimension_numbers<[1], [0], [0], [1], [0, 0, 1, 1], [], []>} : vector<64x32xf32>, vector<32x2xf32>, vector<64x2xf32> -> vector<64x2xf32>
    %16 = vector.extract_strided_slice %15 {offsets = [0, 0], sizes = [32, 2], strides = [1, 1]} : vector<64x2xf32> to vector<32x2xf32>
    %17 = vector.extract_strided_slice %15 {offsets = [32, 0], sizes = [32, 2], strides = [1, 1]} : vector<64x2xf32> to vector<32x2xf32>
    %c0_11 = arith.constant 0 : index
    %c0_12 = arith.constant 0 : index
    %18 = vector.load %arg6[%c0_11, %c0_12] : memref<32x1xf32, #tpu.memory_space<vmem>>, vector<32x1xf32>
    %19 = vector.broadcast %18 : vector<32x1xf32> to vector<32x2xf32>
    %20 = arith.mulf %17, %19 : vector<32x2xf32>
    %21 = arith.addf %16, %20 : vector<32x2xf32>
    %c0_13 = arith.constant 0 : index
    %c0_14 = arith.constant 0 : index
    %22 = vector.load %arg7[%c0_13, %c0_14] : memref<32x1xf32, #tpu.memory_space<vmem>>, vector<32x1xf32>
    %23 = vector.broadcast %22 : vector<32x1xf32> to vector<32x2xf32>
    %24 = arith.addf %21, %23 : vector<32x2xf32>
    %cst_15 = arith.constant 0.000000e+00 : f32
    %25 = vector.broadcast %cst_15 : f32 to vector<32x2xf32>
    %26 = arith.maximumf %24, %25 : vector<32x2xf32>
    %c0_16 = arith.constant 0 : index
    %c0_17 = arith.constant 0 : index
    %27 = vector.load %arg8[%c0_16, %c0_17] : memref<16x32xf32, #tpu.memory_space<vmem>>, vector<16x32xf32>
    %cst_18 = arith.constant dense<0.000000e+00> : vector<16x2xf32>
    %28 = tpu.matmul %27, %26, %cst_18 {dimension_numbers = #tpu.dot_dimension_numbers<[1], [0], [0], [1], [0, 0, 1, 1], [], []>} : vector<16x32xf32>, vector<32x2xf32>, vector<16x2xf32> -> vector<16x2xf32>
    %29 = vector.extract_strided_slice %28 {offsets = [0, 0], sizes = [8, 2], strides = [1, 1]} : vector<16x2xf32> to vector<8x2xf32>
    %30 = vector.extract_strided_slice %28 {offsets = [8, 0], sizes = [8, 2], strides = [1, 1]} : vector<16x2xf32> to vector<8x2xf32>
    %c0_19 = arith.constant 0 : index
    %c0_20 = arith.constant 0 : index
    %31 = vector.load %arg9[%c0_19, %c0_20] : memref<8x1xf32, #tpu.memory_space<vmem>>, vector<8x1xf32>
    %32 = vector.broadcast %31 : vector<8x1xf32> to vector<8x2xf32>
    %33 = arith.mulf %30, %32 : vector<8x2xf32>
    %34 = arith.addf %29, %33 : vector<8x2xf32>
    %c0_21 = arith.constant 0 : index
    %c0_22 = arith.constant 0 : index
    %35 = vector.load %arg10[%c0_21, %c0_22] : memref<8x1xf32, #tpu.memory_space<vmem>>, vector<8x1xf32>
    %36 = vector.broadcast %35 : vector<8x1xf32> to vector<8x2xf32>
    %37 = arith.addf %34, %36 : vector<8x2xf32>
    %38 = math.tanh %37 : vector<8x2xf32>
    %c0_23 = arith.constant 0 : index
    %c0_24 = arith.constant 0 : index
    %39 = vector.load %arg11[%c0_23, %c0_24] : memref<8x2xf32, #tpu.memory_space<vmem>>, vector<8x2xf32>
    tpu.vector_store %arg11[%c0_23, %c0_24], %38 {strides = array<i32>} : memref<8x2xf32, #tpu.memory_space<vmem>>, vector<8x2xf32>,
    return
  }
  func.func @transform_0(%arg0: i32) -> (i32, i32) {
    %c0_i32 = arith.constant 0 : i32
    %c0_i32_0 = arith.constant 0 : i32
    return %c0_i32, %arg0 : i32, i32
  }
  func.func @transform_1(%arg0: i32) -> (i32, i32) {
    %c0_i32 = arith.constant 0 : i32
    %c0_i32_0 = arith.constant 0 : i32
    %c0_i32_1 = arith.constant 0 : i32
    return %c0_i32, %c0_i32_0 : i32, i32
  }
  func.func @transform_2(%arg0: i32) -> (i32, i32) {
    %c0_i32 = arith.constant 0 : i32
    %c0_i32_0 = arith.constant 0 : i32
    %c0_i32_1 = arith.constant 0 : i32
    return %c0_i32, %c0_i32_0 : i32, i32
  }
  func.func @transform_3(%arg0: i32) -> (i32, i32) {
    %c0_i32 = arith.constant 0 : i32
    %c0_i32_0 = arith.constant 0 : i32
    %c0_i32_1 = arith.constant 0 : i32
    return %c0_i32, %c0_i32_0 : i32, i32
  }
  func.func @transform_4(%arg0: i32) -> (i32, i32) {
    %c0_i32 = arith.constant 0 : i32
    %c0_i32_0 = arith.constant 0 : i32
    %c0_i32_1 = arith.constant 0 : i32
    return %c0_i32, %c0_i32_0 : i32, i32
  }
  func.func @transform_5(%arg0: i32) -> (i32, i32) {
    %c0_i32 = arith.constant 0 : i32
    %c0_i32_0 = arith.constant 0 : i32
    %c0_i32_1 = arith.constant 0 : i32
    return %c0_i32, %c0_i32_0 : i32, i32
  }
  func.func @transform_6(%arg0: i32) -> (i32, i32) {
    %c0_i32 = arith.constant 0 : i32
    %c0_i32_0 = arith.constant 0 : i32
    %c0_i32_1 = arith.constant 0 : i32
    return %c0_i32, %c0_i32_0 : i32, i32
  }
  func.func @transform_7(%arg0: i32) -> (i32, i32) {
    %c0_i32 = arith.constant 0 : i32
    %c0_i32_0 = arith.constant 0 : i32
    %c0_i32_1 = arith.constant 0 : i32
    return %c0_i32, %c0_i32_0 : i32, i32
  }
  func.func @transform_8(%arg0: i32) -> (i32, i32) {
    %c0_i32 = arith.constant 0 : i32
    %c0_i32_0 = arith.constant 0 : i32
    %c0_i32_1 = arith.constant 0 : i32
    return %c0_i32, %c0_i32_0 : i32, i32
  }
  func.func @transform_9(%arg0: i32) -> (i32, i32) {
    %c0_i32 = arith.constant 0 : i32
    %c0_i32_0 = arith.constant 0 : i32
    %c0_i32_1 = arith.constant 0 : i32
    return %c0_i32, %c0_i32_0 : i32, i32
  }
  func.func @transform_10(%arg0: i32) -> (i32, i32) {
    %c0_i32 = arith.constant 0 : i32
    %c0_i32_0 = arith.constant 0 : i32
    return %c0_i32, %arg0 : i32, i32
  }
}

</mosaic_0001>

<llo_original>
// kernel: noisy_mlp_forward.1
$region0: #{noisy_mlp_forward.1}
  #allocation0 [shape = 'u32[]', space=smem, size = 0x4, offset = 0x4, fixed_abs, tag = 'smem constant byte address 0x4 - core index']
  #allocation1 [shape = 'u32[144,128]{1,0:T(1,128)}', space=vmem, size = 0x12000, scoped, tag = 'internal scratch']
  %s0 = inlined_call_operand.vmem [shape: f32[16,2], index: 0, kind: input, shape index: {}]
  %s1 = inlined_call_operand.vmem [shape: f32[64,16], index: 1, kind: input, shape index: {}]
  %s2 = inlined_call_operand.vmem [shape: f32[32,1], index: 2, kind: input, shape index: {}]
  %s3 = inlined_call_operand.vmem [shape: f32[32,1], index: 3, kind: input, shape index: {}]
  %s4 = inlined_call_operand.vmem [shape: f32[64,32], index: 4, kind: input, shape index: {}]
  %s5 = inlined_call_operand.vmem [shape: f32[32,1], index: 5, kind: input, shape index: {}]
  %s6 = inlined_call_operand.vmem [shape: f32[32,1], index: 6, kind: input, shape index: {}]
  %s7 = inlined_call_operand.vmem [shape: f32[16,32], index: 7, kind: input, shape index: {}]
  %s8 = inlined_call_operand.vmem [shape: f32[8,1], index: 8, kind: input, shape index: {}]
  %s9 = inlined_call_operand.vmem [shape: f32[8,1], index: 9, kind: input, shape index: {}]
  %s10 = inlined_call_operand.vmem [shape: f32[8,2], index: 10, kind: output, shape index: {}]
  %s11 = sld [smem:[#allocation0]]
  $region50: #{noisy_mlp_forward.1} parent=0
    _
  %s13 = ssub.s32 1, %s11
  %s14 = scalar_select 0, %s13, %s11
  // Predicated region
  $region2: #{noisy_mlp_forward.1} parent=0 // pred_check
    _
  $region3: #{noisy_mlp_forward.1} parent=0 // pred_check_branch
    %16 = sbr.rel (0) target = $region5
  $region4: #{noisy_mlp_forward.1} parent=0 // pred_region
    _
  $region5: #{noisy_mlp_forward.1} parent=0 // pred_fallthru
    _
  // Predicated region
  $region6: #{noisy_mlp_forward.1} parent=0 // pred_check
    _
  $region7: #{noisy_mlp_forward.1} parent=0 // pred_check_branch
    %18 = sbr.rel (0) target = $region9
  $region8: #{noisy_mlp_forward.1} parent=0 // pred_region
    _
  $region9: #{noisy_mlp_forward.1} parent=0 // pred_fallthru
    _
  // Predicated region
  $region10: #{noisy_mlp_forward.1} parent=0 // pred_check
    _
  $region11: #{noisy_mlp_forward.1} parent=0 // pred_check_branch
    %20 = sbr.rel (0) target = $region13
  $region12: #{noisy_mlp_forward.1} parent=0 // pred_region
    _
  $region13: #{noisy_mlp_forward.1} parent=0 // pred_fallthru
    _
  // Predicated region
  $region14: #{noisy_mlp_forward.1} parent=0 // pred_check
    _
  $region15: #{noisy_mlp_forward.1} parent=0 // pred_check_branch
    %22 = sbr.rel (0) target = $region17
  $region16: #{noisy_mlp_forward.1} parent=0 // pred_region
    _
  $region17: #{noisy_mlp_forward.1} parent=0 // pred_fallthru
    _
  // Predicated region
  $region18: #{noisy_mlp_forward.1} parent=0 // pred_check
    _
  $region19: #{noisy_mlp_forward.1} parent=0 // pred_check_branch
    %24 = sbr.rel (0) target = $region21
  $region20: #{noisy_mlp_forward.1} parent=0 // pred_region
    _
  $region21: #{noisy_mlp_forward.1} parent=0 // pred_fallthru
    _
  // Predicated region
  $region22: #{noisy_mlp_forward.1} parent=0 // pred_check
    _
  $region23: #{noisy_mlp_forward.1} parent=0 // pred_check_branch
    %26 = sbr.rel (0) target = $region25
  $region24: #{noisy_mlp_forward.1} parent=0 // pred_region
    _
  $region25: #{noisy_mlp_forward.1} parent=0 // pred_fallthru
    _
  // Predicated region
  $region26: #{noisy_mlp_forward.1} parent=0 // pred_check
    _
  $region27: #{noisy_mlp_forward.1} parent=0 // pred_check_branch
    %28 = sbr.rel (0) target = $region29
  $region28: #{noisy_mlp_forward.1} parent=0 // pred_region
    _
  $region29: #{noisy_mlp_forward.1} parent=0 // pred_fallthru
    _
  // Predicated region
  $region30: #{noisy_mlp_forward.1} parent=0 // pred_check
    _
  $region31: #{noisy_mlp_forward.1} parent=0 // pred_check_branch
    %30 = sbr.rel (0) target = $region33
  $region32: #{noisy_mlp_forward.1} parent=0 // pred_region
    _
  $region33: #{noisy_mlp_forward.1} parent=0 // pred_fallthru
    _
  // Predicated region
  $region34: #{noisy_mlp_forward.1} parent=0 // pred_check
    _
  $region35: #{noisy_mlp_forward.1} parent=0 // pred_check_branch
    %32 = sbr.rel (0) target = $region37
  $region36: #{noisy_mlp_forward.1} parent=0 // pred_region
    _
  $region37: #{noisy_mlp_forward.1} parent=0 // pred_fallthru
    _
  // Predicated region
  $region38: #{noisy_mlp_forward.1} parent=0 // pred_check
    _
  $region39: #{noisy_mlp_forward.1} parent=0 // pred_check_branch
    %34 = sbr.rel (0) target = $region41
  $region40: #{noisy_mlp_forward.1} parent=0 // pred_region
    _
  $region41: #{noisy_mlp_forward.1} parent=0 // pred_fallthru
    _
  %v35 = vld [vmem:[%s0] sm:$0xff]
  %v36 = vld [vmem:[%s0 + $0x8] sm:$0xff]
  %v37 = vld [vmem:[%s1] sm:$0xff]
  %v38 = vld [vmem:[%s1 + $0x8] sm:$0xff]
  %v39 = vld [vmem:[%s1 + $0x10] sm:$0xff]
  %v40 = vld [vmem:[%s1 + $0x18] sm:$0xff]
  %v41 = vld [vmem:[%s1 + $0x20] sm:$0xff]
  %v42 = vld [vmem:[%s1 + $0x28] sm:$0xff]
  %v43 = vld [vmem:[%s1 + $0x30] sm:$0xff]
  %v44 = vld [vmem:[%s1 + $0x38] sm:$0xff]
  %vm45 = vcmask 130048
  %v47 = vsel %vm45, %v37, 0
  %v50 = vsel %vm45, %v38, 0
  %v53 = vsel %vm45, %v39, 0
  %v56 = vsel %vm45, %v40, 0
  %v59 = vsel %vm45, %v41, 0
  %v62 = vsel %vm45, %v42, 0
  %v65 = vsel %vm45, %v43, 0
  %v68 = vsel %vm45, %v44, 0
  %70 = vmatprep.subr.mxu0 0.0
  %71 = vmatpush1.msra.mxu0 0.0
  %72 = vmatprep.subr.mxu0 0.0
  %73 = vmatpush1.msra.mxu0 0.0
  %74 = vmatprep.subr.mxu0 0.0
  %75 = vmatpush1.msra.mxu0 0.0
  %76 = vmatprep.subr.mxu0 0.0
  %77 = vmatpush1.msra.mxu0 0.0
  %78 = vmatprep.subr.mxu0 0.0
  %79 = vmatpush1.msra.mxu0 0.0
  %80 = vmatprep.subr.mxu0 0.0
  %81 = vmatpush1.msra.mxu0 0.0
  %82 = vmatprep.subr.mxu0 0.0
  %83 = vmatpush1.msra.mxu0 0.0
  %84 = vmatprep.subr.mxu0 0.0
  %85 = vmatpush1.msra.mxu0 0.0
  %86 = vmatprep.subr.mxu0 0.0
  %87 = vmatpush1.msra.mxu0 0.0
  %88 = vmatprep.subr.mxu0 0.0
  %89 = vmatpush1.msra.mxu0 0.0
  %90 = vmatprep.subr.mxu0 0.0
  %91 = vmatpush1.msra.mxu0 0.0
  %92 = vmatprep.subr.mxu0 0.0
  %93 = vmatpush1.msra.mxu0 0.0
  %94 = vmatprep.subr.mxu0 0.0
  %95 = vmatpush1.msra.mxu0 0.0
  %96 = vmatprep.subr.mxu0 0.0
  %97 = vmatpush1.msra.mxu0 0.0
  %98 = vmatprep.subr.mxu0 0.0
  %99 = vmatpush1.msra.mxu0 %v36
  %100 = vmatprep.subr.mxu0 0.0
  %101 = vmatpush1.msra.mxu0 %v35
  %102 = vmatprep.subr.mxu0 0.0
  %103 = vmatpush2.msra.mxu0 0.0
  %104 = vmatprep.subr.mxu0 0.0
  %105 = vmatpush2.msra.mxu0 0.0
  %106 = vmatprep.subr.mxu0 0.0
  %107 = vmatpush2.msra.mxu0 0.0
  %108 = vmatprep.subr.mxu0 0.0
  %109 = vmatpush2.msra.mxu0 0.0
  %110 = vmatprep.subr.mxu0 0.0
  %111 = vmatpush2.msra.mxu0 0.0
  %112 = vmatprep.subr.mxu0 0.0
  %113 = vmatpush2.msra.mxu0 0.0
  %114 = vmatprep.subr.mxu0 0.0
  %115 = vmatpush2.msra.mxu0 0.0
  %116 = vmatprep.subr.mxu0 0.0
  %117 = vmatpush2.msra.mxu0 0.0
  %118 = vmatprep.subr.mxu0 0.0
  %119 = vmatpush2.msra.mxu0 0.0
  %120 = vmatprep.subr.mxu0 0.0
  %121 = vmatpush2.msra.mxu0 0.0
  %122 = vmatprep.subr.mxu0 0.0
  %123 = vmatpush2.msra.mxu0 0.0
  %124 = vmatprep.subr.mxu0 0.0
  %125 = vmatpush2.msra.mxu0 0.0
  %126 = vmatprep.subr.mxu0 0.0
  %127 = vmatpush2.msra.mxu0 0.0
  %128 = vmatprep.subr.mxu0 0.0
  %129 = vmatpush2.msra.mxu0 0.0
  %130 = vmatprep.subr.mxu0 0.0
  %131 = vmatpush2.msra.mxu0 0.0
  %132 = vmatprep.subr.mxu0 0.0
  %133 = vmatpush2.msra.mxu0 0.0
  %134 = vmatprep.mubr.f32.mxu0 0.0
  %135 = vmatmul.mubr.f32.gmra.mxu0 %v47
  %v136 = vpop.f32.mrf.mxu0
  %v137 = vadd.f32 0.0, %v136
  %v138 = vpop.f32.mrf.mxu0
  %139 = vmatprep.mubr.f32.mxu0 0.0
  %140 = vmatmul.mubr.f32.gmra.mxu0 %v50
  %v141 = vpop.f32.mrf.mxu0
  %v142 = vadd.f32 0.0, %v141
  %v143 = vpop.f32.mrf.mxu0
  %144 = vmatprep.mubr.f32.mxu0 0.0
  %145 = vmatmul.mubr.f32.gmra.mxu0 %v53
  %v146 = vpop.f32.mrf.mxu0
  %v147 = vadd.f32 0.0, %v146
  %v148 = vpop.f32.mrf.mxu0
  %149 = vmatprep.mubr.f32.mxu0 0.0
  %150 = vmatmul.mubr.f32.gmra.mxu0 %v56
  %v151 = vpop.f32.mrf.mxu0
  %v152 = vadd.f32 0.0, %v151
  %v153 = vpop.f32.mrf.mxu0
  %154 = vmatprep.mubr.f32.mxu0 0.0
  %155 = vmatmul.mubr.f32.gmra.mxu0 %v59
  %v156 = vpop.f32.mrf.mxu0
  %v157 = vadd.f32 0.0, %v156
  %v158 = vpop.f32.mrf.mxu0
  %159 = vmatprep.mubr.f32.mxu0 0.0
  %160 = vmatmul.mubr.f32.gmra.mxu0 %v62
  %v161 = vpop.f32.mrf.mxu0
  %v162 = vadd.f32 0.0, %v161
  %v163 = vpop.f32.mrf.mxu0
  %164 = vmatprep.mubr.f32.mxu0 0.0
  %165 = vmatmul.mubr.f32.gmra.mxu0 %v65
  %v166 = vpop.f32.mrf.mxu0
  %v167 = vadd.f32 0.0, %v166
  %v168 = vpop.f32.mrf.mxu0
  %169 = vmatprep.mubr.f32.mxu0 0.0
  %170 = vmatmul.mubr.f32.gmra.mxu0 %v68
  %v171 = vpop.f32.mrf.mxu0
  %v172 = vadd.f32 0.0, %v171
  %v173 = vpop.f32.mrf.mxu0
  %174 = vdwg.mxu0
  %v175 = vld [vmem:[%s2] sm:$0xff]
  %v176 = vld [vmem:[%s2 + $0x8] sm:$0xff]
  %v177 = vld [vmem:[%s2 + $0x10] sm:$0xff]
  %v178 = vld [vmem:[%s2 + $0x18] sm:$0xff]
  %180 = vset.pattern.permute.xlu0 0
  %181 = vperm.xlu0 %180, %v175
  %v182 = vpop.permute.xlu0 %181
  %185 = vset.pattern.permute.xlu0 0
  %186 = vperm.xlu0 %185, %v176
  %v187 = vpop.permute.xlu0 %186
  %190 = vset.pattern.permute.xlu0 0
  %191 = vperm.xlu0 %190, %v177
  %v192 = vpop.permute.xlu0 %191
  %195 = vset.pattern.permute.xlu0 0
  %196 = vperm.xlu0 %195, %v178
  %v197 = vpop.permute.xlu0 %196
  %v199 = vmul.f32 %v157, %v182
  %v200 = vmul.f32 %v162, %v187
  %v201 = vmul.f32 %v167, %v192
  %v202 = vmul.f32 %v172, %v197
  %v203 = vadd.f32 %v137, %v199
  %v204 = vadd.f32 %v142, %v200
  %v205 = vadd.f32 %v147, %v201
  %v206 = vadd.f32 %v152, %v202
  %v207 = vld [vmem:[%s3] sm:$0xff]
  %v208 = vld [vmem:[%s3 + $0x8] sm:$0xff]
  %v209 = vld [vmem:[%s3 + $0x10] sm:$0xff]
  %v210 = vld [vmem:[%s3 + $0x18] sm:$0xff]
  %212 = vset.pattern.permute.xlu0 0
  %213 = vperm.xlu0 %212, %v207
  %v214 = vpop.permute.xlu0 %213
  %217 = vset.pattern.permute.xlu0 0
  %218 = vperm.xlu0 %217, %v208
  %v219 = vpop.permute.xlu0 %218
  %222 = vset.pattern.permute.xlu0 0
  %223 = vperm.xlu0 %222, %v209
  %v224 = vpop.permute.xlu0 %223
  %227 = vset.pattern.permute.xlu0 0
  %228 = vperm.xlu0 %227, %v210
  %v229 = vpop.permute.xlu0 %228
  %v231 = vadd.f32 %v203, %v214
  %v232 = vadd.f32 %v204, %v219
  %v233 = vadd.f32 %v205, %v224
  %v234 = vadd.f32 %v206, %v229
  %v235 = vmax.f32 %v231, 0.0
  %v236 = vmax.f32 %v232, 0.0
  %v237 = vmax.f32 %v233, 0.0
  %v238 = vmax.f32 %v234, 0.0
  %v239 = vld [vmem:[%s4] sm:$0xff]
  %v240 = vld [vmem:[%s4 + $0x8] sm:$0xff]
  %v241 = vld [vmem:[%s4 + $0x10] sm:$0xff]
  %v242 = vld [vmem:[%s4 + $0x18] sm:$0xff]
  %v243 = vld [vmem:[%s4 + $0x20] sm:$0xff]
  %v244 = vld [vmem:[%s4 + $0x28] sm:$0xff]
  %v245 = vld [vmem:[%s4 + $0x30] sm:$0xff]
  %v246 = vld [vmem:[%s4 + $0x38] sm:$0xff]
  %vm247 = vcmask 261120
  %v249 = vsel %vm247, %v239, 0
  %v252 = vsel %vm247, %v240, 0
  %v255 = vsel %vm247, %v241, 0
  %v258 = vsel %vm247, %v242, 0
  %v261 = vsel %vm247, %v243, 0
  %v264 = vsel %vm247, %v244, 0
  %v267 = vsel %vm247, %v245, 0
  %v270 = vsel %vm247, %v246, 0
  %272 = vmatprep.subr.mxu0 0.0
  %273 = vmatpush1.msra.mxu0 0.0
  %274 = vmatprep.subr.mxu0 0.0
  %275 = vmatpush1.msra.mxu0 0.0
  %276 = vmatprep.subr.mxu0 0.0
  %277 = vmatpush1.msra.mxu0 0.0
  %278 = vmatprep.subr.mxu0 0.0
  %279 = vmatpush1.msra.mxu0 0.0
  %280 = vmatprep.subr.mxu0 0.0
  %281 = vmatpush1.msra.mxu0 0.0
  %282 = vmatprep.subr.mxu0 0.0
  %283 = vmatpush1.msra.mxu0 0.0
  %284 = vmatprep.subr.mxu0 0.0
  %285 = vmatpush1.msra.mxu0 0.0
  %286 = vmatprep.subr.mxu0 0.0
  %287 = vmatpush1.msra.mxu0 0.0
  %288 = vmatprep.subr.mxu0 0.0
  %289 = vmatpush1.msra.mxu0 0.0
  %290 = vmatprep.subr.mxu0 0.0
  %291 = vmatpush1.msra.mxu0 0.0
  %292 = vmatprep.subr.mxu0 0.0
  %293 = vmatpush1.msra.mxu0 0.0
  %294 = vmatprep.subr.mxu0 0.0
  %295 = vmatpush1.msra.mxu0 0.0
  %296 = vmatprep.subr.mxu0 0.0
  %297 = vmatpush1.msra.mxu0 %v238
  %298 = vmatprep.subr.mxu0 0.0
  %299 = vmatpush1.msra.mxu0 %v237
  %300 = vmatprep.subr.mxu0 0.0
  %301 = vmatpush1.msra.mxu0 %v236
  %302 = vmatprep.subr.mxu0 0.0
  %303 = vmatpush1.msra.mxu0 %v235
  %304 = vmatprep.subr.mxu0 0.0
  %305 = vmatpush2.msra.mxu0 0.0
  %306 = vmatprep.subr.mxu0 0.0
  %307 = vmatpush2.msra.mxu0 0.0
  %308 = vmatprep.subr.mxu0 0.0
  %309 = vmatpush2.msra.mxu0 0.0
  %310 = vmatprep.subr.mxu0 0.0
  %311 = vmatpush2.msra.mxu0 0.0
  %312 = vmatprep.subr.mxu0 0.0
  %313 = vmatpush2.msra.mxu0 0.0
  %314 = vmatprep.subr.mxu0 0.0
  %315 = vmatpush2.msra.mxu0 0.0
  %316 = vmatprep.subr.mxu0 0.0
  %317 = vmatpush2.msra.mxu0 0.0
  %318 = vmatprep.subr.mxu0 0.0
  %319 = vmatpush2.msra.mxu0 0.0
  %320 = vmatprep.subr.mxu0 0.0
  %321 = vmatpush2.msra.mxu0 0.0
  %322 = vmatprep.subr.mxu0 0.0
  %323 = vmatpush2.msra.mxu0 0.0
  %324 = vmatprep.subr.mxu0 0.0
  %325 = vmatpush2.msra.mxu0 0.0
  %326 = vmatprep.subr.mxu0 0.0
  %327 = vmatpush2.msra.mxu0 0.0
  %328 = vmatprep.subr.mxu0 0.0
  %329 = vmatpush2.msra.mxu0 0.0
  %330 = vmatprep.subr.mxu0 0.0
  %331 = vmatpush2.msra.mxu0 0.0
  %332 = vmatprep.subr.mxu0 0.0
  %333 = vmatpush2.msra.mxu0 0.0
  %334 = vmatprep.subr.mxu0 0.0
  %335 = vmatpush2.msra.mxu0 0.0
  %336 = vmatprep.mubr.f32.mxu0 0.0
  %337 = vmatmul.mubr.f32.gmra.mxu0 %v249
  %v338 = vpop.f32.mrf.mxu0
  %v339 = vadd.f32 0.0, %v338
  %v340 = vpop.f32.mrf.mxu0
  %341 = vmatprep.mubr.f32.mxu0 0.0
  %342 = vmatmul.mubr.f32.gmra.mxu0 %v252
  %v343 = vpop.f32.mrf.mxu0
  %v344 = vadd.f32 0.0, %v343
  %v345 = vpop.f32.mrf.mxu0
  %346 = vmatprep.mubr.f32.mxu0 0.0
  %347 = vmatmul.mubr.f32.gmra.mxu0 %v255
  %v348 = vpop.f32.mrf.mxu0
  %v349 = vadd.f32 0.0, %v348
  %v350 = vpop.f32.mrf.mxu0
  %351 = vmatprep.mubr.f32.mxu0 0.0
  %352 = vmatmul.mubr.f32.gmra.mxu0 %v258
  %v353 = vpop.f32.mrf.mxu0
  %v354 = vadd.f32 0.0, %v353
  %v355 = vpop.f32.mrf.mxu0
  %356 = vmatprep.mubr.f32.mxu0 0.0
  %357 = vmatmul.mubr.f32.gmra.mxu0 %v261
  %v358 = vpop.f32.mrf.mxu0
  %v359 = vadd.f32 0.0, %v358
  %v360 = vpop.f32.mrf.mxu0
  %361 = vmatprep.mubr.f32.mxu0 0.0
  %362 = vmatmul.mubr.f32.gmra.mxu0 %v264
  %v363 = vpop.f32.mrf.mxu0
  %v364 = vadd.f32 0.0, %v363
  %v365 = vpop.f32.mrf.mxu0
  %366 = vmatprep.mubr.f32.mxu0 0.0
  %367 = vmatmul.mubr.f32.gmra.mxu0 %v267
  %v368 = vpop.f32.mrf.mxu0
  %v369 = vadd.f32 0.0, %v368
  %v370 = vpop.f32.mrf.mxu0
  %371 = vmatprep.mubr.f32.mxu0 0.0
  %372 = vmatmul.mubr.f32.gmra.mxu0 %v270
  %v373 = vpop.f32.mrf.mxu0
  %v374 = vadd.f32 0.0, %v373
  %v375 = vpop.f32.mrf.mxu0
  %376 = vdwg.mxu0
  %v377 = vld [vmem:[%s5] sm:$0xff]
  %v378 = vld [vmem:[%s5 + $0x8] sm:$0xff]
  %v379 = vld [vmem:[%s5 + $0x10] sm:$0xff]
  %v380 = vld [vmem:[%s5 + $0x18] sm:$0xff]
  %382 = vset.pattern.permute.xlu0 0
  %383 = vperm.xlu0 %382, %v377
  %v384 = vpop.permute.xlu0 %383
  %387 = vset.pattern.permute.xlu0 0
  %388 = vperm.xlu0 %387, %v378
  %v389 = vpop.permute.xlu0 %388
  %392 = vset.pattern.permute.xlu0 0
  %393 = vperm.xlu0 %392, %v379
  %v394 = vpop.permute.xlu0 %393
  %397 = vset.pattern.permute.xlu0 0
  %398 = vperm.xlu0 %397, %v380
  %v399 = vpop.permute.xlu0 %398
  %v401 = vmul.f32 %v359, %v384
  %v402 = vmul.f32 %v364, %v389
  %v403 = vmul.f32 %v369, %v394
  %v404 = vmul.f32 %v374, %v399
  %v405 = vadd.f32 %v339, %v401
  %v406 = vadd.f32 %v344, %v402
  %v407 = vadd.f32 %v349, %v403
  %v408 = vadd.f32 %v354, %v404
  %v409 = vld [vmem:[%s6] sm:$0xff]
  %v410 = vld [vmem:[%s6 + $0x8] sm:$0xff]
  %v411 = vld [vmem:[%s6 + $0x10] sm:$0xff]
  %v412 = vld [vmem:[%s6 + $0x18] sm:$0xff]
  %414 = vset.pattern.permute.xlu0 0
  %415 = vperm.xlu0 %414, %v409
  %v416 = vpop.permute.xlu0 %415
  %419 = vset.pattern.permute.xlu0 0
  %420 = vperm.xlu0 %419, %v410
  %v421 = vpop.permute.xlu0 %420
  %424 = vset.pattern.permute.xlu0 0
  %425 = vperm.xlu0 %424, %v411
  %v426 = vpop.permute.xlu0 %425
  %429 = vset.pattern.permute.xlu0 0
  %430 = vperm.xlu0 %429, %v412
  %v431 = vpop.permute.xlu0 %430
  %v433 = vadd.f32 %v405, %v416
  %v434 = vadd.f32 %v406, %v421
  %v435 = vadd.f32 %v407, %v426
  %v436 = vadd.f32 %v408, %v431
  %v437 = vmax.f32 %v433, 0.0
  %v438 = vmax.f32 %v434, 0.0
  %v439 = vmax.f32 %v435, 0.0
  %v440 = vmax.f32 %v436, 0.0
  %v441 = vld [vmem:[%s7] sm:$0xff]
  %v442 = vld [vmem:[%s7 + $0x8] sm:$0xff]
  %v444 = vsel %vm247, %v441, 0
  %v447 = vsel %vm247, %v442, 0
  %449 = vmatprep.subr.mxu0 0.0
  %450 = vmatpush1.msra.mxu0 0.0
  %451 = vmatprep.subr.mxu0 0.0
  %452 = vmatpush1.msra.mxu0 0.0
  %453 = vmatprep.subr.mxu0 0.0
  %454 = vmatpush1.msra.mxu0 0.0
  %455 = vmatprep.subr.mxu0 0.0
  %456 = vmatpush1.msra.mxu0 0.0
  %457 = vmatprep.subr.mxu0 0.0
  %458 = vmatpush1.msra.mxu0 0.0
  %459 = vmatprep.subr.mxu0 0.0
  %460 = vmatpush1.msra.mxu0 0.0
  %461 = vmatprep.subr.mxu0 0.0
  %462 = vmatpush1.msra.mxu0 0.0
  %463 = vmatprep.subr.mxu0 0.0
  %464 = vmatpush1.msra.mxu0 0.0
  %465 = vmatprep.subr.mxu0 0.0
  %466 = vmatpush1.msra.mxu0 0.0
  %467 = vmatprep.subr.mxu0 0.0
  %468 = vmatpush1.msra.mxu0 0.0
  %469 = vmatprep.subr.mxu0 0.0
  %470 = vmatpush1.msra.mxu0 0.0
  %471 = vmatprep.subr.mxu0 0.0
  %472 = vmatpush1.msra.mxu0 0.0
  %473 = vmatprep.subr.mxu0 0.0
  %474 = vmatpush1.msra.mxu0 %v440
  %475 = vmatprep.subr.mxu0 0.0
  %476 = vmatpush1.msra.mxu0 %v439
  %477 = vmatprep.subr.mxu0 0.0
  %478 = vmatpush1.msra.mxu0 %v438
  %479 = vmatprep.subr.mxu0 0.0
  %480 = vmatpush1.msra.mxu0 %v437
  %481 = vmatprep.subr.mxu0 0.0
  %482 = vmatpush2.msra.mxu0 0.0
  %483 = vmatprep.subr.mxu0 0.0
  %484 = vmatpush2.msra.mxu0 0.0
  %485 = vmatprep.subr.mxu0 0.0
  %486 = vmatpush2.msra.mxu0 0.0
  %487 = vmatprep.subr.mxu0 0.0
  %488 = vmatpush2.msra.mxu0 0.0
  %489 = vmatprep.subr.mxu0 0.0
  %490 = vmatpush2.msra.mxu0 0.0
  %491 = vmatprep.subr.mxu0 0.0
  %492 = vmatpush2.msra.mxu0 0.0
  %493 = vmatprep.subr.mxu0 0.0
  %494 = vmatpush2.msra.mxu0 0.0
  %495 = vmatprep.subr.mxu0 0.0
  %496 = vmatpush2.msra.mxu0 0.0
  %497 = vmatprep.subr.mxu0 0.0
  %498 = vmatpush2.msra.mxu0 0.0
  %499 = vmatprep.subr.mxu0 0.0
  %500 = vmatpush2.msra.mxu0 0.0
  %501 = vmatprep.subr.mxu0 0.0
  %502 = vmatpush2.msra.mxu0 0.0
  %503 = vmatprep.subr.mxu0 0.0
  %504 = vmatpush2.msra.mxu0 0.0
  %505 = vmatprep.subr.mxu0 0.0
  %506 = vmatpush2.msra.mxu0 0.0
  %507 = vmatprep.subr.mxu0 0.0
  %508 = vmatpush2.msra.mxu0 0.0
  %509 = vmatprep.subr.mxu0 0.0
  %510 = vmatpush2.msra.mxu0 0.0
  %511 = vmatprep.subr.mxu0 0.0
  %512 = vmatpush2.msra.mxu0 0.0
  %513 = vmatprep.mubr.f32.mxu0 0.0
  %514 = vmatmul.mubr.f32.gmra.mxu0 %v444
  %v515 = vpop.f32.mrf.mxu0
  %v516 = vadd.f32 0.0, %v515
  %v517 = vpop.f32.mrf.mxu0
  %518 = vmatprep.mubr.f32.mxu0 0.0
  %519 = vmatmul.mubr.f32.gmra.mxu0 %v447
  %v520 = vpop.f32.mrf.mxu0
  %v521 = vadd.f32 0.0, %v520
  %v522 = vpop.f32.mrf.mxu0
  %523 = vdwg.mxu0
  %v524 = vld [vmem:[%s8] sm:$0xff]
  %526 = vset.pattern.permute.xlu0 0
  %527 = vperm.xlu0 %526, %v524
  %v528 = vpop.permute.xlu0 %527
  %v530 = vmul.f32 %v521, %v528
  %v531 = vadd.f32 %v516, %v530
  %v532 = vld [vmem:[%s9] sm:$0xff]
  %534 = vset.pattern.permute.xlu0 0
  %535 = vperm.xlu0 %534, %v532
  %v536 = vpop.permute.xlu0 %535
  %v538 = vadd.f32 %v531, %v536
  %v539 = vtanh.pop %v538
  %vm540 = vcmask 15360
  %541 = vst.msk [vmem:[%s10] sm:$0xff] %vm540, %v539
  // Predicated region
  $region42: #{noisy_mlp_forward.1} parent=0 // pred_check
    _
  $region43: #{noisy_mlp_forward.1} parent=0 // pred_check_branch
    %543 = sbr.rel (0) target = $region45
  $region44: #{noisy_mlp_forward.1} parent=0 // pred_region
    _
  $region45: #{noisy_mlp_forward.1} parent=0 // pred_fallthru
    _
  // Predicated region
  $region46: #{noisy_mlp_forward.1} parent=0 // pred_check
    _
  $region47: #{noisy_mlp_forward.1} parent=0 // pred_check_branch
    %545 = sbr.rel (0) target = $region49
  $region48: #{noisy_mlp_forward.1} parent=0 // pred_region
    _
  $region49: #{noisy_mlp_forward.1} parent=0 // pred_fallthru
    _

</llo_original>
